<compile_context>
chip_gen: v7x
topology: tpu7x:2x2x1
jax: 0.10.0
libtpu: 0.0.40
codegen_flags: <defaults>
</compile_context>

<pallas_src>
import functools

import jax
import jax.numpy as jnp
from jax import lax
from jax.experimental import pallas as pl
from jax.experimental.pallas import tpu as pltpu

INPUT_SIZE = 28
HIDDEN = 64
NUM_CLASSES = 10
BATCH_PAD = 8    # sublane-tile padded batch rows
OUT_PAD = 128    # lane-dense padded classifier width


def lstm_classify_kernel(x_ref, w_ih_ref, w_hh_ref, w_out_ref, b_out_ref,
                         out_ref, *, seq_len):
    # x_ref: (T*8, I+1) time-major, last column is ones (folded bias).
    # One big MXU call for every timestep's input projection + bias.
    # i/f/o gate columns arrive pre-scaled by 0.5 (for the tanh-sigmoid trick).
    precomp = jnp.dot(x_ref[...], w_ih_ref[...],
                      preferred_element_type=jnp.float32)      # (T*8, 4H)

    # Recurrent state lives in vregs as loop-carried values (module passes
    # None for the initial state -> zeros). Full (8, H) sublane tiles.
    h = jnp.zeros((BATCH_PAD, HIDDEN), jnp.float32)
    c = jnp.zeros((BATCH_PAD, HIDDEN), jnp.float32)

    # Fully unrolled time loop: only h @ W_hh + one tanh sit on the serial
    # dependence chain. W_hh is bf16; accumulate in f32 on the MXU.
    for t in range(seq_len):
        gates = (precomp[t * BATCH_PAD:(t + 1) * BATCH_PAD, :]
                 + jnp.dot(h.astype(jnp.bfloat16), w_hh_ref[...],
                           preferred_element_type=jnp.float32))  # (8, 4H)

        t_all = jnp.tanh(gates)                       # single EUP pass, 4H lanes
        ifo = 0.5 * t_all[:, :3 * HIDDEN] + 0.5       # sigmoid(z) = 0.5*tanh(z/2)+0.5
        g = t_all[:, 3 * HIDDEN:]
        i = ifo[:, 0 * HIDDEN:1 * HIDDEN]
        f = ifo[:, 1 * HIDDEN:2 * HIDDEN]
        o = ifo[:, 2 * HIDDEN:3 * HIDDEN]

        c = f * c + i * g
        h = o * jnp.tanh(c)

    # out = Linear(h_T); W_out / b_out are zero-padded to 128 lanes so this
    # store is lane-dense (wrapper slices back to B x 10).
    out_ref[...] = (jnp.dot(h, w_out_ref[...],
                            preferred_element_type=jnp.float32)
                    + b_out_ref[...])


def _reorder_gates(w_t):
    """Reorder (K, 4H) gate columns from PyTorch (i, f, g, o) to (i, f, o, g)."""
    i_, f_, g_, o_ = jnp.split(w_t, 4, axis=-1)
    return jnp.concatenate([i_, f_, o_, g_], axis=-1)


def rnn_forward(x, params):
    """x: (B, T, INPUT_SIZE) float32 -> logits (B, 10)."""
    B, T, I = x.shape
    assert I == INPUT_SIZE
    assert B <= BATCH_PAD

    # Time-major layout, batch padded to 8 rows per step, plus a ones column
    # that carries the (folded) LSTM bias through the input-projection matmul.
    xt = jnp.transpose(x, (1, 0, 2))                               # (T, B, I)
    x_pad = jnp.zeros((T, BATCH_PAD, I), jnp.float32).at[:, :B, :].set(xt)
    x_ext = jnp.concatenate(
        [x_pad, jnp.ones((T, BATCH_PAD, 1), jnp.float32)], axis=-1
    ).reshape(T * BATCH_PAD, I + 1)                                # (T*8, I+1)

    # Pre-transpose weights so kernel matmuls are plain (M,K)@(K,N); reorder
    # gate columns to (i, f, o, g); append the fused bias as the last W_ih row.
    w_ih_t = _reorder_gates(params["w_ih"].T)                      # (I, 4H)
    b = _reorder_gates((params["b_ih"] + params["b_hh"])
                       .reshape(1, 4 * HIDDEN))                    # (1, 4H)
    w_ih_ext = jnp.concatenate([w_ih_t, b], axis=0)                # (I+1, 4H)
    w_hh = _reorder_gates(params["w_hh"].T)                        # (H, 4H)

    # Pre-scale the i/f/o columns by 0.5 so the kernel can use a single tanh
    # (sigmoid(z) = 0.5*tanh(z/2) + 0.5). The g columns stay unscaled.
    col_scale = jnp.concatenate(
        [jnp.full((3 * HIDDEN,), 0.5, jnp.float32),
         jnp.ones((HIDDEN,), jnp.float32)])
    w_ih_ext = w_ih_ext * col_scale
    w_hh = (w_hh * col_scale).astype(jnp.bfloat16)                 # bf16 MXU operand

    # Zero-pad the classifier to a lane-dense 128-wide output.
    w_out = jnp.zeros((HIDDEN, OUT_PAD), jnp.float32)
    w_out = w_out.at[:, :NUM_CLASSES].set(params["w_out"].T)
    b_out = jnp.zeros((1, OUT_PAD), jnp.float32)
    b_out = b_out.at[:, :NUM_CLASSES].set(params["b_out"])

    grid_spec = pltpu.PrefetchScalarGridSpec(
        num_scalar_prefetch=0,
        grid=(1,),
        in_specs=[
            pl.BlockSpec((T * BATCH_PAD, I + 1), lambda n: (0, 0)),   # x + ones
            pl.BlockSpec((I + 1, 4 * HIDDEN), lambda n: (0, 0)),      # W_ih^T + bias row
            pl.BlockSpec((HIDDEN, 4 * HIDDEN), lambda n: (0, 0)),     # W_hh^T (bf16)
            pl.BlockSpec((HIDDEN, OUT_PAD), lambda n: (0, 0)),        # W_out^T (padded)
            pl.BlockSpec((1, OUT_PAD), lambda n: (0, 0)),             # b_out (padded)
        ],
        out_specs=pl.BlockSpec((BATCH_PAD, OUT_PAD), lambda n: (0, 0)),
    )

    out_padded = pl.pallas_call(
        functools.partial(lstm_classify_kernel, seq_len=T),
        out_shape=jax.ShapeDtypeStruct((BATCH_PAD, OUT_PAD), jnp.float32),
        grid_spec=grid_spec,
        compiler_params=pltpu.CompilerParams(
            dimension_semantics=("arbitrary",)),
    )(x_ext, w_ih_ext, w_hh, w_out, b_out)

    return out_padded[:B, :NUM_CLASSES]


def reference_forward(x, params):
    """Pure-JAX reference matching torch.nn.LSTM + Linear semantics."""
    B, T, I = x.shape
    w_ih, w_hh = params["w_ih"], params["w_hh"]
    b = params["b_ih"] + params["b_hh"]

    def step(carry, x_t):
        h, c = carry
        gates = x_t @ w_ih.T + h @ w_hh.T + b
        i_, f_, g_, o_ = jnp.split(gates, 4, axis=-1)
        i_ = jax.nn.sigmoid(i_)
        f_ = jax.nn.sigmoid(f_)
        g_ = jnp.tanh(g_)
        o_ = jax.nn.sigmoid(o_)
        c = f_ * c + i_ * g_
        h = o_ * jnp.tanh(c)
        return (h, c), h

    h0 = jnp.zeros((B, HIDDEN), jnp.float32)
    c0 = jnp.zeros((B, HIDDEN), jnp.float32)
    (h_T, _), _ = lax.scan(step, (h0, c0), jnp.transpose(x, (1, 0, 2)))
    return h_T @ params["w_out"].T + params["b_out"]


if __name__ == "__main__":
    key = jax.random.PRNGKey(0)
    B, T = 2, 8
    keys = jax.random.split(key, 7)
    k = 1.0 / float(jnp.sqrt(HIDDEN))  # PyTorch default uniform init bound

    params = {
        "w_ih": jax.random.uniform(keys[0], (4 * HIDDEN, INPUT_SIZE), jnp.float32, -k, k),
        "w_hh": jax.random.uniform(keys[1], (4 * HIDDEN, HIDDEN), jnp.float32, -k, k),
        "b_ih": jax.random.uniform(keys[2], (4 * HIDDEN,), jnp.float32, -k, k),
        "b_hh": jax.random.uniform(keys[3], (4 * HIDDEN,), jnp.float32, -k, k),
        "w_out": jax.random.uniform(keys[4], (NUM_CLASSES, HIDDEN), jnp.float32, -k, k),
        "b_out": jax.random.uniform(keys[5], (NUM_CLASSES,), jnp.float32, -k, k),
    }
    x = jax.random.normal(keys[6], (B, T, INPUT_SIZE), jnp.float32)

    out = jax.block_until_ready(rnn_forward(x, params))
    assert out.shape == (B, NUM_CLASSES)

    ref = reference_forward(x, params)
    max_err = float(jnp.max(jnp.abs(out - ref)))
    assert jnp.allclose(out, ref, atol=1e-2, rtol=1e-2), f"max abs err {max_err}"

    print("KERNEL_OK")
</pallas_src>

<mosaic_0001>
module attributes {stable_mosaic.version = 11 : i64} {
  func.func @lstm_classify_kernel(%arg0: i32, %arg1: memref<64x29xf32, #tpu.memory_space<vmem>>, %arg2: memref<29x256xf32, #tpu.memory_space<vmem>>, %arg3: memref<64x256xbf16, #tpu.memory_space<vmem>>, %arg4: memref<64x128xf32, #tpu.memory_space<vmem>>, %arg5: memref<1x128xf32, #tpu.memory_space<vmem>>, %arg6: memref<8x128xf32, #tpu.memory_space<vmem>>) attributes {dimension_semantics = [#tpu.dimension_semantics<arbitrary>], iteration_bounds = array<i64: 1>, scalar_prefetch = 0 : i64, scratch_operands = 0 : i64, tpu.core_type = #tpu.core_type<tc>, window_params = [{pipeline_mode = #tpu.pipeline_mode<synchronous>, transform_indices = @transform_0, window_bounds = array<i64: 64, 29>}, {pipeline_mode = #tpu.pipeline_mode<synchronous>, transform_indices = @transform_1, window_bounds = array<i64: 29, 256>}, {pipeline_mode = #tpu.pipeline_mode<synchronous>, transform_indices = @transform_2, window_bounds = array<i64: 64, 256>}, {pipeline_mode = #tpu.pipeline_mode<synchronous>, transform_indices = @transform_3, window_bounds = array<i64: 64, 128>}, {pipeline_mode = #tpu.pipeline_mode<synchronous>, transform_indices = @transform_4, window_bounds = array<i64: 1, 128>}, {pipeline_mode = #tpu.pipeline_mode<synchronous>, transform_indices = @transform_5, window_bounds = array<i64: 8, 128>}]} {
    %c0 = arith.constant 0 : index
    %c0_0 = arith.constant 0 : index
    %0 = vector.load %arg1[%c0, %c0_0] : memref<64x29xf32, #tpu.memory_space<vmem>>, vector<64x29xf32>
    %c0_1 = arith.constant 0 : index
    %c0_2 = arith.constant 0 : index
    %1 = vector.load %arg2[%c0_1, %c0_2] : memref<29x256xf32, #tpu.memory_space<vmem>>, vector<29x256xf32>
    %cst = arith.constant dense<0.000000e+00> : vector<64x256xf32>
    %2 = tpu.matmul %0, %1, %cst {dimension_numbers = #tpu.dot_dimension_numbers<[1], [0], [0], [1], [0, 0, 1, 1], [], []>} : vector<64x29xf32>, vector<29x256xf32>, vector<64x256xf32> -> vector<64x256xf32>
    %cst_3 = arith.constant 0.000000e+00 : f32
    %3 = vector.broadcast %cst_3 : f32 to vector<8x64xf32>
    %cst_4 = arith.constant 0.000000e+00 : f32
    %4 = vector.broadcast %cst_4 : f32 to vector<8x64xf32>
    %5 = vector.extract_strided_slice %2 {offsets = [0, 0], sizes = [8, 256], strides = [1, 1]} : vector<64x256xf32> to vector<8x256xf32>
    %6 = arith.truncf %3 : vector<8x64xf32> to vector<8x64xbf16>
    %c0_5 = arith.constant 0 : index
    %c0_6 = arith.constant 0 : index
    %7 = vector.load %arg3[%c0_5, %c0_6] : memref<64x256xbf16, #tpu.memory_space<vmem>>, vector<64x256xbf16>
    %cst_7 = arith.constant dense<0.000000e+00> : vector<8x256xf32>
    %8 = tpu.matmul %6, %7, %cst_7 {dimension_numbers = #tpu.dot_dimension_numbers<[1], [0], [0], [1], [0, 0, 1, 1], [], []>} : vector<8x64xbf16>, vector<64x256xbf16>, vector<8x256xf32> -> vector<8x256xf32>
    %9 = arith.addf %5, %8 : vector<8x256xf32>
    %10 = math.tanh %9 : vector<8x256xf32>
    %11 = vector.extract_strided_slice %10 {offsets = [0, 0], sizes = [8, 192], strides = [1, 1]} : vector<8x256xf32> to vector<8x192xf32>
    %cst_8 = arith.constant 5.000000e-01 : f32
    %12 = vector.broadcast %cst_8 : f32 to vector<8x192xf32>
    %13 = arith.mulf %12, %11 : vector<8x192xf32>
    %cst_9 = arith.constant 5.000000e-01 : f32
    %14 = vector.broadcast %cst_9 : f32 to vector<8x192xf32>
    %15 = arith.addf %13, %14 : vector<8x192xf32>
    %16 = vector.extract_strided_slice %10 {offsets = [0, 192], sizes = [8, 64], strides = [1, 1]} : vector<8x256xf32> to vector<8x64xf32>
    %17 = vector.extract_strided_slice %15 {offsets = [0, 0], sizes = [8, 64], strides = [1, 1]} : vector<8x192xf32> to vector<8x64xf32>
    %18 = vector.extract_strided_slice %15 {offsets = [0, 64], sizes = [8, 64], strides = [1, 1]} : vector<8x192xf32> to vector<8x64xf32>
    %19 = vector.extract_strided_slice %15 {offsets = [0, 128], sizes = [8, 64], strides = [1, 1]} : vector<8x192xf32> to vector<8x64xf32>
    %20 = arith.mulf %18, %4 : vector<8x64xf32>
    %21 = arith.mulf %17, %16 : vector<8x64xf32>
    %22 = arith.addf %20, %21 : vector<8x64xf32>
    %23 = math.tanh %22 : vector<8x64xf32>
    %24 = arith.mulf %19, %23 : vector<8x64xf32>
    %25 = vector.extract_strided_slice %2 {offsets = [8, 0], sizes = [8, 256], strides = [1, 1]} : vector<64x256xf32> to vector<8x256xf32>
    %26 = arith.truncf %24 : vector<8x64xf32> to vector<8x64xbf16>
    %c0_10 = arith.constant 0 : index
    %c0_11 = arith.constant 0 : index
    %27 = vector.load %arg3[%c0_10, %c0_11] : memref<64x256xbf16, #tpu.memory_space<vmem>>, vector<64x256xbf16>
    %cst_12 = arith.constant dense<0.000000e+00> : vector<8x256xf32>
    %28 = tpu.matmul %26, %27, %cst_12 {dimension_numbers = #tpu.dot_dimension_numbers<[1], [0], [0], [1], [0, 0, 1, 1], [], []>} : vector<8x64xbf16>, vector<64x256xbf16>, vector<8x256xf32> -> vector<8x256xf32>
    %29 = arith.addf %25, %28 : vector<8x256xf32>
    %30 = math.tanh %29 : vector<8x256xf32>
    %31 = vector.extract_strided_slice %30 {offsets = [0, 0], sizes = [8, 192], strides = [1, 1]} : vector<8x256xf32> to vector<8x192xf32>
    %cst_13 = arith.constant 5.000000e-01 : f32
    %32 = vector.broadcast %cst_13 : f32 to vector<8x192xf32>
    %33 = arith.mulf %32, %31 : vector<8x192xf32>
    %cst_14 = arith.constant 5.000000e-01 : f32
    %34 = vector.broadcast %cst_14 : f32 to vector<8x192xf32>
    %35 = arith.addf %33, %34 : vector<8x192xf32>
    %36 = vector.extract_strided_slice %30 {offsets = [0, 192], sizes = [8, 64], strides = [1, 1]} : vector<8x256xf32> to vector<8x64xf32>
    %37 = vector.extract_strided_slice %35 {offsets = [0, 0], sizes = [8, 64], strides = [1, 1]} : vector<8x192xf32> to vector<8x64xf32>
    %38 = vector.extract_strided_slice %35 {offsets = [0, 64], sizes = [8, 64], strides = [1, 1]} : vector<8x192xf32> to vector<8x64xf32>
    %39 = vector.extract_strided_slice %35 {offsets = [0, 128], sizes = [8, 64], strides = [1, 1]} : vector<8x192xf32> to vector<8x64xf32>
    %40 = arith.mulf %38, %22 : vector<8x64xf32>
    %41 = arith.mulf %37, %36 : vector<8x64xf32>
    %42 = arith.addf %40, %41 : vector<8x64xf32>
    %43 = math.tanh %42 : vector<8x64xf32>
    %44 = arith.mulf %39, %43 : vector<8x64xf32>
    %45 = vector.extract_strided_slice %2 {offsets = [16, 0], sizes = [8, 256], strides = [1, 1]} : vector<64x256xf32> to vector<8x256xf32>
    %46 = arith.truncf %44 : vector<8x64xf32> to vector<8x64xbf16>
    %c0_15 = arith.constant 0 : index
    %c0_16 = arith.constant 0 : index
    %47 = vector.load %arg3[%c0_15, %c0_16] : memref<64x256xbf16, #tpu.memory_space<vmem>>, vector<64x256xbf16>
    %cst_17 = arith.constant dense<0.000000e+00> : vector<8x256xf32>
    %48 = tpu.matmul %46, %47, %cst_17 {dimension_numbers = #tpu.dot_dimension_numbers<[1], [0], [0], [1], [0, 0, 1, 1], [], []>} : vector<8x64xbf16>, vector<64x256xbf16>, vector<8x256xf32> -> vector<8x256xf32>
    %49 = arith.addf %45, %48 : vector<8x256xf32>
    %50 = math.tanh %49 : vector<8x256xf32>
    %51 = vector.extract_strided_slice %50 {offsets = [0, 0], sizes = [8, 192], strides = [1, 1]} : vector<8x256xf32> to vector<8x192xf32>
    %cst_18 = arith.constant 5.000000e-01 : f32
    %52 = vector.broadcast %cst_18 : f32 to vector<8x192xf32>
    %53 = arith.mulf %52, %51 : vector<8x192xf32>
    %cst_19 = arith.constant 5.000000e-01 : f32
    %54 = vector.broadcast %cst_19 : f32 to vector<8x192xf32>
    %55 = arith.addf %53, %54 : vector<8x192xf32>
    %56 = vector.extract_strided_slice %50 {offsets = [0, 192], sizes = [8, 64], strides = [1, 1]} : vector<8x256xf32> to vector<8x64xf32>
    %57 = vector.extract_strided_slice %55 {offsets = [0, 0], sizes = [8, 64], strides = [1, 1]} : vector<8x192xf32> to vector<8x64xf32>
    %58 = vector.extract_strided_slice %55 {offsets = [0, 64], sizes = [8, 64], strides = [1, 1]} : vector<8x192xf32> to vector<8x64xf32>
    %59 = vector.extract_strided_slice %55 {offsets = [0, 128], sizes = [8, 64], strides = [1, 1]} : vector<8x192xf32> to vector<8x64xf32>
    %60 = arith.mulf %58, %42 : vector<8x64xf32>
    %61 = arith.mulf %57, %56 : vector<8x64xf32>
    %62 = arith.addf %60, %61 : vector<8x64xf32>
    %63 = math.tanh %62 : vector<8x64xf32>
    %64 = arith.mulf %59, %63 : vector<8x64xf32>
    %65 = vector.extract_strided_slice %2 {offsets = [24, 0], sizes = [8, 256], strides = [1, 1]} : vector<64x256xf32> to vector<8x256xf32>
    %66 = arith.truncf %64 : vector<8x64xf32> to vector<8x64xbf16>
    %c0_20 = arith.constant 0 : index
    %c0_21 = arith.constant 0 : index
    %67 = vector.load %arg3[%c0_20, %c0_21] : memref<64x256xbf16, #tpu.memory_space<vmem>>, vector<64x256xbf16>
    %cst_22 = arith.constant dense<0.000000e+00> : vector<8x256xf32>
    %68 = tpu.matmul %66, %67, %cst_22 {dimension_numbers = #tpu.dot_dimension_numbers<[1], [0], [0], [1], [0, 0, 1, 1], [], []>} : vector<8x64xbf16>, vector<64x256xbf16>, vector<8x256xf32> -> vector<8x256xf32>
    %69 = arith.addf %65, %68 : vector<8x256xf32>
    %70 = math.tanh %69 : vector<8x256xf32>
    %71 = vector.extract_strided_slice %70 {offsets = [0, 0], sizes = [8, 192], strides = [1, 1]} : vector<8x256xf32> to vector<8x192xf32>
    %cst_23 = arith.constant 5.000000e-01 : f32
    %72 = vector.broadcast %cst_23 : f32 to vector<8x192xf32>
    %73 = arith.mulf %72, %71 : vector<8x192xf32>
    %cst_24 = arith.constant 5.000000e-01 : f32
    %74 = vector.broadcast %cst_24 : f32 to vector<8x192xf32>
    %75 = arith.addf %73, %74 : vector<8x192xf32>
    %76 = vector.extract_strided_slice %70 {offsets = [0, 192], sizes = [8, 64], strides = [1, 1]} : vector<8x256xf32> to vector<8x64xf32>
    %77 = vector.extract_strided_slice %75 {offsets = [0, 0], sizes = [8, 64], strides = [1, 1]} : vector<8x192xf32> to vector<8x64xf32>
    %78 = vector.extract_strided_slice %75 {offsets = [0, 64], sizes = [8, 64], strides = [1, 1]} : vector<8x192xf32> to vector<8x64xf32>
    %79 = vector.extract_strided_slice %75 {offsets = [0, 128], sizes = [8, 64], strides = [1, 1]} : vector<8x192xf32> to vector<8x64xf32>
    %80 = arith.mulf %78, %62 : vector<8x64xf32>
    %81 = arith.mulf %77, %76 : vector<8x64xf32>
    %82 = arith.addf %80, %81 : vector<8x64xf32>
    %83 = math.tanh %82 : vector<8x64xf32>
    %84 = arith.mulf %79, %83 : vector<8x64xf32>
    %85 = vector.extract_strided_slice %2 {offsets = [32, 0], sizes = [8, 256], strides = [1, 1]} : vector<64x256xf32> to vector<8x256xf32>
    %86 = arith.truncf %84 : vector<8x64xf32> to vector<8x64xbf16>
    %c0_25 = arith.constant 0 : index
    %c0_26 = arith.constant 0 : index
    %87 = vector.load %arg3[%c0_25, %c0_26] : memref<64x256xbf16, #tpu.memory_space<vmem>>, vector<64x256xbf16>
    %cst_27 = arith.constant dense<0.000000e+00> : vector<8x256xf32>
    %88 = tpu.matmul %86, %87, %cst_27 {dimension_numbers = #tpu.dot_dimension_numbers<[1], [0], [0], [1], [0, 0, 1, 1], [], []>} : vector<8x64xbf16>, vector<64x256xbf16>, vector<8x256xf32> -> vector<8x256xf32>
    %89 = arith.addf %85, %88 : vector<8x256xf32>
    %90 = math.tanh %89 : vector<8x256xf32>
    %91 = vector.extract_strided_slice %90 {offsets = [0, 0], sizes = [8, 192], strides = [1, 1]} : vector<8x256xf32> to vector<8x192xf32>
    %cst_28 = arith.constant 5.000000e-01 : f32
    %92 = vector.broadcast %cst_28 : f32 to vector<8x192xf32>
    %93 = arith.mulf %92, %91 : vector<8x192xf32>
    %cst_29 = arith.constant 5.000000e-01 : f32
    %94 = vector.broadcast %cst_29 : f32 to vector<8x192xf32>
    %95 = arith.addf %93, %94 : vector<8x192xf32>
    %96 = vector.extract_strided_slice %90 {offsets = [0, 192], sizes = [8, 64], strides = [1, 1]} : vector<8x256xf32> to vector<8x64xf32>
    %97 = vector.extract_strided_slice %95 {offsets = [0, 0], sizes = [8, 64], strides = [1, 1]} : vector<8x192xf32> to vector<8x64xf32>
    %98 = vector.extract_strided_slice %95 {offsets = [0, 64], sizes = [8, 64], strides = [1, 1]} : vector<8x192xf32> to vector<8x64xf32>
    %99 = vector.extract_strided_slice %95 {offsets = [0, 128], sizes = [8, 64], strides = [1, 1]} : vector<8x192xf32> to vector<8x64xf32>
    %100 = arith.mulf %98, %82 : vector<8x64xf32>
    %101 = arith.mulf %97, %96 : vector<8x64xf32>
    %102 = arith.addf %100, %101 : vector<8x64xf32>
    %103 = math.tanh %102 : vector<8x64xf32>
    %104 = arith.mulf %99, %103 : vector<8x64xf32>
    %105 = vector.extract_strided_slice %2 {offsets = [40, 0], sizes = [8, 256], strides = [1, 1]} : vector<64x256xf32> to vector<8x256xf32>
    %106 = arith.truncf %104 : vector<8x64xf32> to vector<8x64xbf16>
    %c0_30 = arith.constant 0 : index
    %c0_31 = arith.constant 0 : index
    %107 = vector.load %arg3[%c0_30, %c0_31] : memref<64x256xbf16, #tpu.memory_space<vmem>>, vector<64x256xbf16>
    %cst_32 = arith.constant dense<0.000000e+00> : vector<8x256xf32>
    %108 = tpu.matmul %106, %107, %cst_32 {dimension_numbers = #tpu.dot_dimension_numbers<[1], [0], [0], [1], [0, 0, 1, 1], [], []>} : vector<8x64xbf16>, vector<64x256xbf16>, vector<8x256xf32> -> vector<8x256xf32>
    %109 = arith.addf %105, %108 : vector<8x256xf32>
    %110 = math.tanh %109 : vector<8x256xf32>
    %111 = vector.extract_strided_slice %110 {offsets = [0, 0], sizes = [8, 192], strides = [1, 1]} : vector<8x256xf32> to vector<8x192xf32>
    %cst_33 = arith.constant 5.000000e-01 : f32
    %112 = vector.broadcast %cst_33 : f32 to vector<8x192xf32>
    %113 = arith.mulf %112, %111 : vector<8x192xf32>
    %cst_34 = arith.constant 5.000000e-01 : f32
    %114 = vector.broadcast %cst_34 : f32 to vector<8x192xf32>
    %115 = arith.addf %113, %114 : vector<8x192xf32>
    %116 = vector.extract_strided_slice %110 {offsets = [0, 192], sizes = [8, 64], strides = [1, 1]} : vector<8x256xf32> to vector<8x64xf32>
    %117 = vector.extract_strided_slice %115 {offsets = [0, 0], sizes = [8, 64], strides = [1, 1]} : vector<8x192xf32> to vector<8x64xf32>
    %118 = vector.extract_strided_slice %115 {offsets = [0, 64], sizes = [8, 64], strides = [1, 1]} : vector<8x192xf32> to vector<8x64xf32>
    %119 = vector.extract_strided_slice %115 {offsets = [0, 128], sizes = [8, 64], strides = [1, 1]} : vector<8x192xf32> to vector<8x64xf32>
    %120 = arith.mulf %118, %102 : vector<8x64xf32>
    %121 = arith.mulf %117, %116 : vector<8x64xf32>
    %122 = arith.addf %120, %121 : vector<8x64xf32>
    %123 = math.tanh %122 : vector<8x64xf32>
    %124 = arith.mulf %119, %123 : vector<8x64xf32>
    %125 = vector.extract_strided_slice %2 {offsets = [48, 0], sizes = [8, 256], strides = [1, 1]} : vector<64x256xf32> to vector<8x256xf32>
    %126 = arith.truncf %124 : vector<8x64xf32> to vector<8x64xbf16>
    %c0_35 = arith.constant 0 : index
    %c0_36 = arith.constant 0 : index
    %127 = vector.load %arg3[%c0_35, %c0_36] : memref<64x256xbf16, #tpu.memory_space<vmem>>, vector<64x256xbf16>
    %cst_37 = arith.constant dense<0.000000e+00> : vector<8x256xf32>
    %128 = tpu.matmul %126, %127, %cst_37 {dimension_numbers = #tpu.dot_dimension_numbers<[1], [0], [0], [1], [0, 0, 1, 1], [], []>} : vector<8x64xbf16>, vector<64x256xbf16>, vector<8x256xf32> -> vector<8x256xf32>
    %129 = arith.addf %125, %128 : vector<8x256xf32>
    %130 = math.tanh %129 : vector<8x256xf32>
    %131 = vector.extract_strided_slice %130 {offsets = [0, 0], sizes = [8, 192], strides = [1, 1]} : vector<8x256xf32> to vector<8x192xf32>
    %cst_38 = arith.constant 5.000000e-01 : f32
    %132 = vector.broadcast %cst_38 : f32 to vector<8x192xf32>
    %133 = arith.mulf %132, %131 : vector<8x192xf32>
    %cst_39 = arith.constant 5.000000e-01 : f32
    %134 = vector.broadcast %cst_39 : f32 to vector<8x192xf32>
    %135 = arith.addf %133, %134 : vector<8x192xf32>
    %136 = vector.extract_strided_slice %130 {offsets = [0, 192], sizes = [8, 64], strides = [1, 1]} : vector<8x256xf32> to vector<8x64xf32>
    %137 = vector.extract_strided_slice %135 {offsets = [0, 0], sizes = [8, 64], strides = [1, 1]} : vector<8x192xf32> to vector<8x64xf32>
    %138 = vector.extract_strided_slice %135 {offsets = [0, 64], sizes = [8, 64], strides = [1, 1]} : vector<8x192xf32> to vector<8x64xf32>
    %139 = vector.extract_strided_slice %135 {offsets = [0, 128], sizes = [8, 64], strides = [1, 1]} : vector<8x192xf32> to vector<8x64xf32>
    %140 = arith.mulf %138, %122 : vector<8x64xf32>
    %141 = arith.mulf %137, %136 : vector<8x64xf32>
    %142 = arith.addf %140, %141 : vector<8x64xf32>
    %143 = math.tanh %142 : vector<8x64xf32>
    %144 = arith.mulf %139, %143 : vector<8x64xf32>
    %145 = vector.extract_strided_slice %2 {offsets = [56, 0], sizes = [8, 256], strides = [1, 1]} : vector<64x256xf32> to vector<8x256xf32>
    %146 = arith.truncf %144 : vector<8x64xf32> to vector<8x64xbf16>
    %c0_40 = arith.constant 0 : index
    %c0_41 = arith.constant 0 : index
    %147 = vector.load %arg3[%c0_40, %c0_41] : memref<64x256xbf16, #tpu.memory_space<vmem>>, vector<64x256xbf16>
    %cst_42 = arith.constant dense<0.000000e+00> : vector<8x256xf32>
    %148 = tpu.matmul %146, %147, %cst_42 {dimension_numbers = #tpu.dot_dimension_numbers<[1], [0], [0], [1], [0, 0, 1, 1], [], []>} : vector<8x64xbf16>, vector<64x256xbf16>, vector<8x256xf32> -> vector<8x256xf32>
    %149 = arith.addf %145, %148 : vector<8x256xf32>
    %150 = math.tanh %149 : vector<8x256xf32>
    %151 = vector.extract_strided_slice %150 {offsets = [0, 0], sizes = [8, 192], strides = [1, 1]} : vector<8x256xf32> to vector<8x192xf32>
    %cst_43 = arith.constant 5.000000e-01 : f32
    %152 = vector.broadcast %cst_43 : f32 to vector<8x192xf32>
    %153 = arith.mulf %152, %151 : vector<8x192xf32>
    %cst_44 = arith.constant 5.000000e-01 : f32
    %154 = vector.broadcast %cst_44 : f32 to vector<8x192xf32>
    %155 = arith.addf %153, %154 : vector<8x192xf32>
    %156 = vector.extract_strided_slice %150 {offsets = [0, 192], sizes = [8, 64], strides = [1, 1]} : vector<8x256xf32> to vector<8x64xf32>
    %157 = vector.extract_strided_slice %155 {offsets = [0, 0], sizes = [8, 64], strides = [1, 1]} : vector<8x192xf32> to vector<8x64xf32>
    %158 = vector.extract_strided_slice %155 {offsets = [0, 64], sizes = [8, 64], strides = [1, 1]} : vector<8x192xf32> to vector<8x64xf32>
    %159 = vector.extract_strided_slice %155 {offsets = [0, 128], sizes = [8, 64], strides = [1, 1]} : vector<8x192xf32> to vector<8x64xf32>
    %160 = arith.mulf %158, %142 : vector<8x64xf32>
    %161 = arith.mulf %157, %156 : vector<8x64xf32>
    %162 = arith.addf %160, %161 : vector<8x64xf32>
    %163 = math.tanh %162 : vector<8x64xf32>
    %164 = arith.mulf %159, %163 : vector<8x64xf32>
    %c0_45 = arith.constant 0 : index
    %c0_46 = arith.constant 0 : index
    %165 = vector.load %arg4[%c0_45, %c0_46] : memref<64x128xf32, #tpu.memory_space<vmem>>, vector<64x128xf32>
    %cst_47 = arith.constant dense<0.000000e+00> : vector<8x128xf32>
    %166 = tpu.matmul %164, %165, %cst_47 {dimension_numbers = #tpu.dot_dimension_numbers<[1], [0], [0], [1], [0, 0, 1, 1], [], []>} : vector<8x64xf32>, vector<64x128xf32>, vector<8x128xf32> -> vector<8x128xf32>
    %c0_48 = arith.constant 0 : index
    %c0_49 = arith.constant 0 : index
    %167 = vector.load %arg5[%c0_48, %c0_49] : memref<1x128xf32, #tpu.memory_space<vmem>>, vector<1x128xf32>
    %168 = vector.broadcast %167 : vector<1x128xf32> to vector<8x128xf32>
    %169 = arith.addf %166, %168 : vector<8x128xf32>
    %c0_50 = arith.constant 0 : index
    %c0_51 = arith.constant 0 : index
    %170 = vector.load %arg6[%c0_50, %c0_51] : memref<8x128xf32, #tpu.memory_space<vmem>>, vector<8x128xf32>
    tpu.vector_store %arg6[%c0_50, %c0_51], %169 {strides = array<i32>} : memref<8x128xf32, #tpu.memory_space<vmem>>, vector<8x128xf32>,
    return
  }
  func.func @transform_0(%arg0: i32) -> (i32, i32) {
    %c0_i32 = arith.constant 0 : i32
    %c0_i32_0 = arith.constant 0 : i32
    %c0_i32_1 = arith.constant 0 : i32
    return %c0_i32, %c0_i32_0 : i32, i32
  }
  func.func @transform_1(%arg0: i32) -> (i32, i32) {
    %c0_i32 = arith.constant 0 : i32
    %c0_i32_0 = arith.constant 0 : i32
    %c0_i32_1 = arith.constant 0 : i32
    return %c0_i32, %c0_i32_0 : i32, i32
  }
  func.func @transform_2(%arg0: i32) -> (i32, i32) {
    %c0_i32 = arith.constant 0 : i32
    %c0_i32_0 = arith.constant 0 : i32
    %c0_i32_1 = arith.constant 0 : i32
    return %c0_i32, %c0_i32_0 : i32, i32
  }
  func.func @transform_3(%arg0: i32) -> (i32, i32) {
    %c0_i32 = arith.constant 0 : i32
    %c0_i32_0 = arith.constant 0 : i32
    %c0_i32_1 = arith.constant 0 : i32
    return %c0_i32, %c0_i32_0 : i32, i32
  }
  func.func @transform_4(%arg0: i32) -> (i32, i32) {
    %c0_i32 = arith.constant 0 : i32
    %c0_i32_0 = arith.constant 0 : i32
    %c0_i32_1 = arith.constant 0 : i32
    return %c0_i32, %c0_i32_0 : i32, i32
  }
  func.func @transform_5(%arg0: i32) -> (i32, i32) {
    %c0_i32 = arith.constant 0 : i32
    %c0_i32_0 = arith.constant 0 : i32
    %c0_i32_1 = arith.constant 0 : i32
    return %c0_i32, %c0_i32_0 : i32, i32
  }
}

</mosaic_0001>

<llo_original>
// kernel: tpu_custom_call.1
$region0: #{tpu_custom_call.1}
  #allocation0 [shape = 'u32[]', space=smem, size = 0x4, offset = 0x4, fixed_abs, tag = 'smem constant byte address 0x4 - core index']
  #allocation1 [shape = 'u32[144,128]{1,0:T(1,128)}', space=vmem, size = 0x12000, scoped, tag = 'internal scratch']
  %s0 = inlined_call_operand.vmem [shape: f32[64,29], index: 0, kind: input, shape index: {}]
  %s1 = inlined_call_operand.vmem [shape: f32[29,256], index: 1, kind: input, shape index: {}]
  %s2 = inlined_call_operand.hbm [shape: bf16[64,256], index: 2, kind: input, shape index: {}]
  %s3 = inlined_call_operand.hbm [shape: f32[64,128], index: 3, kind: input, shape index: {}]
  %s4 = inlined_call_operand.vmem [shape: f32[1,128], index: 4, kind: input, shape index: {}]
  %s5 = inlined_call_operand.hbm [shape: f32[8,128], index: 5, kind: output, shape index: {}]
  %s6 = sld [smem:[#allocation0]]
  $region38: #{tpu_custom_call.1} parent=0
    _
  %s8 = ssub.s32 1, %s6
  %s9 = scalar_select 0, %s8, %s6
  $region1: #{tpu_custom_call.1} parent=0
    #allocation2 [shape = 'u8[32768]{0}', space=vmem, size = 0x8000, scoped, tag = 'input window, operand 2, single buffered']
    #allocation3 [shape = 's32[1]{0}', space=sflag, size = 0x4, scoped, tag = 'scoped memory for tpu_custom_call.1']
    #allocation4 [shape = 's32[1]{0}', space=sflag, size = 0x4, scoped, tag = 'scoped memory for tpu_custom_call.1']
    #allocation5 [shape = 'u8[32768]{0}', space=vmem, size = 0x8000, scoped, tag = 'input window, operand 3, single buffered']
    #allocation6 [shape = 's32[1]{0}', space=sflag, size = 0x4, scoped, tag = 'scoped memory for tpu_custom_call.1']
    #allocation7 [shape = 'u8[4096]{0}', space=vmem, size = 0x1000, scoped, tag = 'output window, operand 0, single buffered']
    %10 = vsyncpa [#allocation3], 0
    %11 = vsyncpa [#allocation6], 0
    %12 = vsyncpa [#allocation4], 0
    // Predicated region
    $region2: #{tpu_custom_call.1} parent=1 // pred_check
      _
    $region3: #{tpu_custom_call.1} parent=1 // pred_check_branch
      %14 = sbr.rel (0) target = $region5
    $region4: #{tpu_custom_call.1} parent=1 // pred_region
      _
    $region5: #{tpu_custom_call.1} parent=1 // pred_fallthru
      _
    // Predicated region
    $region6: #{tpu_custom_call.1} parent=1 // pred_check
      _
    $region7: #{tpu_custom_call.1} parent=1 // pred_check_branch
      %16 = sbr.rel (0) target = $region9
    $region8: #{tpu_custom_call.1} parent=1 // pred_region
      _
    $region9: #{tpu_custom_call.1} parent=1 // pred_fallthru
      _
    // Predicated region
    $region10: #{tpu_custom_call.1} parent=1 // pred_check
      _
    $region11: #{tpu_custom_call.1} parent=1 // pred_check_branch
      %18 = sbr.rel (0) target = $region13
    $region12: #{tpu_custom_call.1} parent=1 // pred_region
      %s20 = ssub.s32 1024, 1024
      %21 = vsyncadd [#allocation3], %s20
      %s22 = sshll.u32 [#allocation2], 4
      %s23 = int_to_ptr.vmem [resolvable:$true] %s22
      %28 = dma.hbm_to_vmem [thread:$0]  %s2, 1024, %s23, [#allocation3], 128, 128, 8
    $region13: #{tpu_custom_call.1} parent=1 // pred_fallthru
      _
    // Predicated region
    $region14: #{tpu_custom_call.1} parent=1 // pred_check
      _
    $region15: #{tpu_custom_call.1} parent=1 // pred_check_branch
      %30 = sbr.rel (0) target = $region17
    $region16: #{tpu_custom_call.1} parent=1 // pred_region
      %s32 = ssub.s32 1024, 1024
      %33 = vsyncadd [#allocation6], %s32
      %s34 = sshll.u32 [#allocation5], 4
      %s35 = int_to_ptr.vmem [resolvable:$true] %s34
      %40 = dma.hbm_to_vmem [thread:$0]  %s3, 1024, %s35, [#allocation6], 128, 128, 8
    $region17: #{tpu_custom_call.1} parent=1 // pred_fallthru
      _
    // Predicated region
    $region18: #{tpu_custom_call.1} parent=1 // pred_check
      _
    $region19: #{tpu_custom_call.1} parent=1 // pred_check_branch
      %42 = sbr.rel (0) target = $region21
    $region20: #{tpu_custom_call.1} parent=1 // pred_region
      _
    $region21: #{tpu_custom_call.1} parent=1 // pred_fallthru
      _
    // Predicated region
    $region22: #{tpu_custom_call.1} parent=1 // pred_check
      _
    $region23: #{tpu_custom_call.1} parent=1 // pred_check_branch
      %44 = sbr.rel (0) target = $region25
    $region24: #{tpu_custom_call.1} parent=1 // pred_region
      %45 = dma.done [#allocation3], 1024
    $region25: #{tpu_custom_call.1} parent=1 // pred_fallthru
      _
    // Predicated region
    $region26: #{tpu_custom_call.1} parent=1 // pred_check
      _
    $region27: #{tpu_custom_call.1} parent=1 // pred_check_branch
      %47 = sbr.rel (0) target = $region29
    $region28: #{tpu_custom_call.1} parent=1 // pred_region
      %48 = dma.done [#allocation6], 1024
    $region29: #{tpu_custom_call.1} parent=1 // pred_fallthru
      _
    %v50 = vld [vmem:[%s0] sm:$0xff]
    %v51 = vld [vmem:[%s0 + $0x8] sm:$0xff]
    %v52 = vld [vmem:[%s0 + $0x10] sm:$0xff]
    %v53 = vld [vmem:[%s0 + $0x18] sm:$0xff]
    %v54 = vld [vmem:[%s0 + $0x20] sm:$0xff]
    %v55 = vld [vmem:[%s0 + $0x28] sm:$0xff]
    %v56 = vld [vmem:[%s0 + $0x30] sm:$0xff]
    %v57 = vld [vmem:[%s0 + $0x38] sm:$0xff]
    %v58 = vld [vmem:[%s1] sm:$0xff]
    %v59 = vld [vmem:[%s1 + $0x8] sm:$0xff]
    %v60 = vld [vmem:[%s1 + $0x10] sm:$0xff]
    %v61 = vld [vmem:[%s1 + $0x18] sm:$0xff]
    %v62 = vld [vmem:[%s1 + $0x20] sm:$0xff]
    %v63 = vld [vmem:[%s1 + $0x28] sm:$0xff]
    %v64 = vld [vmem:[%s1 + $0x30] sm:$0x1f]
    %v65 = vld [vmem:[%s1 + $0x38] sm:$0x1f]
    %vm66 = vcmask 236544
    %v68 = vsel %vm66, %v50, 0
    %v71 = vsel %vm66, %v51, 0
    %v74 = vsel %vm66, %v52, 0
    %v77 = vsel %vm66, %v53, 0
    %v80 = vsel %vm66, %v54, 0
    %v83 = vsel %vm66, %v55, 0
    %v86 = vsel %vm66, %v56, 0
    %v89 = vsel %vm66, %v57, 0
    %vm91 = vcmask 1044480
    %v93 = vsel %vm91, %v64, 0
    %v96 = vsel %vm91, %v65, 0
    %98 = vmatprep.subr.mxu0 %v59
    %99 = vmatpush1.msra.mxu0 %v58
    %100 = vmatprep.subr.mxu0 %v61
    %101 = vmatpush1.msra.mxu0 %v60
    %102 = vmatprep.subr.mxu0 %v63
    %103 = vmatpush1.msra.mxu0 %v62
    %104 = vmatprep.subr.mxu0 %v96
    %105 = vmatpush1.msra.mxu0 %v93
    %106 = vmatprep.subr.mxu0 0.0
    %107 = vmatpush1.msra.mxu0 0.0
    %108 = vmatprep.subr.mxu0 0.0
    %109 = vmatpush1.msra.mxu0 0.0
    %110 = vmatprep.subr.mxu0 0.0
    %111 = vmatpush1.msra.mxu0 0.0
    %112 = vmatprep.subr.mxu0 0.0
    %113 = vmatpush1.msra.mxu0 0.0
    %114 = vmatprep.subr.mxu0 0.0
    %115 = vmatpush1.msra.mxu0 0.0
    %116 = vmatprep.subr.mxu0 0.0
    %117 = vmatpush1.msra.mxu0 0.0
    %118 = vmatprep.subr.mxu0 0.0
    %119 = vmatpush1.msra.mxu0 0.0
    %120 = vmatprep.subr.mxu0 0.0
    %121 = vmatpush1.msra.mxu0 0.0
    %122 = vmatprep.subr.mxu0 0.0
    %123 = vmatpush1.msra.mxu0 0.0
    %124 = vmatprep.subr.mxu0 0.0
    %125 = vmatpush1.msra.mxu0 0.0
    %126 = vmatprep.subr.mxu0 0.0
    %127 = vmatpush1.msra.mxu0 0.0
    %128 = vmatprep.subr.mxu0 0.0
    %129 = vmatpush1.msra.mxu0 0.0
    %130 = vmatprep.subr.mxu0 0.0
    %131 = vmatpush1.msra.mxu0 0.0
    %132 = vmatprep.subr.mxu0 0.0
    %133 = vmatpush1.msra.mxu0 0.0
    %134 = vmatprep.subr.mxu0 0.0
    %135 = vmatpush1.msra.mxu0 0.0
    %136 = vmatprep.subr.mxu0 0.0
    %137 = vmatpush1.msra.mxu0 0.0
    %138 = vmatprep.subr.mxu0 0.0
    %139 = vmatpush1.msra.mxu0 0.0
    %140 = vmatprep.subr.mxu0 0.0
    %141 = vmatpush1.msra.mxu0 0.0
    %142 = vmatprep.subr.mxu0 0.0
    %143 = vmatpush1.msra.mxu0 0.0
    %144 = vmatprep.subr.mxu0 0.0
    %145 = vmatpush1.msra.mxu0 0.0
    %146 = vmatprep.subr.mxu0 0.0
    %147 = vmatpush1.msra.mxu0 0.0
    %148 = vmatprep.subr.mxu0 0.0
    %149 = vmatpush1.msra.mxu0 0.0
    %150 = vmatprep.subr.mxu0 0.0
    %151 = vmatpush1.msra.mxu0 0.0
    %152 = vmatprep.subr.mxu0 0.0
    %153 = vmatpush1.msra.mxu0 0.0
    %154 = vmatprep.subr.mxu0 0.0
    %155 = vmatpush1.msra.mxu0 0.0
    %156 = vmatprep.subr.mxu0 0.0
    %157 = vmatpush1.msra.mxu0 0.0
    %158 = vmatprep.subr.mxu0 0.0
    %159 = vmatpush1.msra.mxu0 0.0
    %160 = vmatprep.subr.mxu0 0.0
    %161 = vmatpush1.msra.mxu0 0.0
    %162 = vmatprep.mubr.f32.mxu0 0.0
    %163 = vmatmul.mubr.f32.gmra.mrb[0].mxu0 %v68
    %v164 = vpop.f32.mrb[0].mxu0
    %v165 = vadd.f32 0.0, %v164
    %v166 = vpop.f32.mrb[0].mxu0
    %v167 = vadd.f32 0.0, %v166
    %168 = vmatprep.mubr.f32.mxu0 0.0
    %169 = vmatmul.mubr.f32.gmra.mrb[0].mxu0 %v71
    %v170 = vpop.f32.mrb[0].mxu0
    %v171 = vadd.f32 0.0, %v170
    %v172 = vpop.f32.mrb[0].mxu0
    %v173 = vadd.f32 0.0, %v172
    %174 = vmatprep.mubr.f32.mxu0 0.0
    %175 = vmatmul.mubr.f32.gmra.mrb[0].mxu0 %v74
    %v176 = vpop.f32.mrb[0].mxu0
    %v177 = vadd.f32 0.0, %v176
    %v178 = vpop.f32.mrb[0].mxu0
    %v179 = vadd.f32 0.0, %v178
    %180 = vmatprep.mubr.f32.mxu0 0.0
    %181 = vmatmul.mubr.f32.gmra.mrb[0].mxu0 %v77
    %v182 = vpop.f32.mrb[0].mxu0
    %v183 = vadd.f32 0.0, %v182
    %v184 = vpop.f32.mrb[0].mxu0
    %v185 = vadd.f32 0.0, %v184
    %186 = vmatprep.mubr.f32.mxu0 0.0
    %187 = vmatmul.mubr.f32.gmra.mrb[0].mxu0 %v80
    %v188 = vpop.f32.mrb[0].mxu0
    %v189 = vadd.f32 0.0, %v188
    %v190 = vpop.f32.mrb[0].mxu0
    %v191 = vadd.f32 0.0, %v190
    %192 = vmatprep.mubr.f32.mxu0 0.0
    %193 = vmatmul.mubr.f32.gmra.mrb[0].mxu0 %v83
    %v194 = vpop.f32.mrb[0].mxu0
    %v195 = vadd.f32 0.0, %v194
    %v196 = vpop.f32.mrb[0].mxu0
    %v197 = vadd.f32 0.0, %v196
    %198 = vmatprep.mubr.f32.mxu0 0.0
    %199 = vmatmul.mubr.f32.gmra.mrb[0].mxu0 %v86
    %v200 = vpop.f32.mrb[0].mxu0
    %v201 = vadd.f32 0.0, %v200
    %v202 = vpop.f32.mrb[0].mxu0
    %v203 = vadd.f32 0.0, %v202
    %204 = vmatprep.mubr.f32.mxu0 0.0
    %205 = vmatmul.mubr.f32.gmra.mrb[0].mxu0 %v89
    %v206 = vpop.f32.mrb[0].mxu0
    %v207 = vadd.f32 0.0, %v206
    %v208 = vpop.f32.mrb[0].mxu0
    %v209 = vadd.f32 0.0, %v208
    %210 = vdwg.mxu0
    %v211 = vld [vmem:[#allocation2] sm:$0xff]
    %v212 = vld [vmem:[#allocation2 + $0x8] sm:$0xff]
    %v213 = vld [vmem:[#allocation2 + $0x10] sm:$0xff]
    %v214 = vld [vmem:[#allocation2 + $0x18] sm:$0xff]
    %v215 = vld [vmem:[#allocation2 + $0x20] sm:$0xff]
    %v216 = vld [vmem:[#allocation2 + $0x28] sm:$0xff]
    %v217 = vld [vmem:[#allocation2 + $0x30] sm:$0xff]
    %v218 = vld [vmem:[#allocation2 + $0x38] sm:$0xff]
    %v227 = vunpack.c.l.b16 %v211
    %v228 = vunpack.c.h.b16 %v211
    %v229 = vunpack.c.l.b16 %v212
    %v230 = vunpack.c.h.b16 %v212
    %v231 = vunpack.c.l.b16 %v213
    %v232 = vunpack.c.h.b16 %v213
    %v233 = vunpack.c.l.b16 %v214
    %v234 = vunpack.c.h.b16 %v214
    %v235 = vunpack.c.l.b16 %v215
    %v236 = vunpack.c.h.b16 %v215
    %v237 = vunpack.c.l.b16 %v216
    %v238 = vunpack.c.h.b16 %v216
    %v239 = vunpack.c.l.b16 %v217
    %v240 = vunpack.c.h.b16 %v217
    %v241 = vunpack.c.l.b16 %v218
    %v242 = vunpack.c.h.b16 %v218
    %v243 = vpack.c.b16 %v229, %v227
    %v244 = vpack.c.b16 %v230, %v228
    %v245 = vpack.c.b16 %v233, %v231
    %v246 = vpack.c.b16 %v234, %v232
    %v247 = vpack.c.b16 %v237, %v235
    %v248 = vpack.c.b16 %v238, %v236
    %v249 = vpack.c.b16 %v241, %v239
    %v250 = vpack.c.b16 %v242, %v240
    %vm259 = vcmask 523264
    %v261 = vsel %vm259, 0, 0
    %263 = vmatprep.subr.bf16.mxu0 %v244
    %264 = vmatpush1.bf16.msra.mxu0 %v243
    %265 = vmatprep.subr.bf16.mxu0 %v246
    %266 = vmatpush1.bf16.msra.mxu0 %v245
    %267 = vmatprep.subr.bf16.mxu0 %v248
    %268 = vmatpush1.bf16.msra.mxu0 %v247
    %269 = vmatprep.subr.bf16.mxu0 %v250
    %270 = vmatpush1.bf16.msra.mxu0 %v249
    %271 = vmatprep.subr.bf16.mxu0 0
    %272 = vmatpush1.bf16.msra.mxu0 0
    %273 = vmatprep.subr.bf16.mxu0 0
    %274 = vmatpush1.bf16.msra.mxu0 0
    %275 = vmatprep.subr.bf16.mxu0 0
    %276 = vmatpush1.bf16.msra.mxu0 0
    %277 = vmatprep.subr.bf16.mxu0 0
    %278 = vmatpush1.bf16.msra.mxu0 0
    %279 = vmatprep.subr.bf16.mxu0 0
    %280 = vmatpush1.bf16.msra.mxu0 0
    %281 = vmatprep.subr.bf16.mxu0 0
    %282 = vmatpush1.bf16.msra.mxu0 0
    %283 = vmatprep.subr.bf16.mxu0 0
    %284 = vmatpush1.bf16.msra.mxu0 0
    %285 = vmatprep.subr.bf16.mxu0 0
    %286 = vmatpush1.bf16.msra.mxu0 0
    %287 = vmatprep.subr.bf16.mxu0 0
    %288 = vmatpush1.bf16.msra.mxu0 0
    %289 = vmatprep.subr.bf16.mxu0 0
    %290 = vmatpush1.bf16.msra.mxu0 0
    %291 = vmatprep.subr.bf16.mxu0 0
    %292 = vmatpush1.bf16.msra.mxu0 0
    %293 = vmatprep.subr.bf16.mxu0 0
    %294 = vmatpush1.bf16.msra.mxu0 0
    %295 = vmatprep.mubr.bf16.mxu0 0
    %296 = vmatmul.mubr.bf16.gmra.mrb[0].mxu0 %v261
    %v297 = vpop.f32.mrb[0].mxu0
    %v298 = vadd.f32 0.0, %v297
    %v299 = vpop.f32.mrb[0].mxu0
    %v300 = vadd.f32 0.0, %v299
    %v301 = vpop.f32.mrb[0].mxu0
    %v302 = vpop.f32.mrb[0].mxu0
    %303 = vdwg.mxu0
    %v304 = vadd.f32 %v165, %v298
    %v305 = vadd.f32 %v167, %v300
    %v306 = vtanh.pop %v304
    %v307 = vtanh.pop %v305
    %v308 = vmul.f32 %v306, 0.5
    %v309 = vmul.f32 %v307, 0.5
    %v310 = vadd.f32 %v308, 0.5
    %v311 = vadd.f32 %v309, 0.5
    %v312 = vmul.f32 %v310, 0.0
    %314 = vrot.lane.b32.xlu0 %v307, 64
    %v315 = vpop.permute.xlu0 %314
    %v317 = vmul.f32 %v310, %v315
    %319 = vrot.lane.b32.xlu0 %v317, 64
    %v320 = vpop.permute.xlu0 %319
    %v322 = vadd.f32 %v312, %v320
    %v323 = vtanh.pop %v322
    %325 = vrot.lane.b32.xlu0 %v323, 64
    %v326 = vpop.permute.xlu0 %325
    %v328 = vmul.f32 %v311, %v326
    %v329 = vpack.c.bf16 %v328, %v328
    %v331 = vsel %vm259, %v329, 0
    %333 = vmatprep.subr.bf16.mxu0 %v244
    %334 = vmatpush1.bf16.msra.mxu0 %v243
    %335 = vmatprep.subr.bf16.mxu0 %v246
    %336 = vmatpush1.bf16.msra.mxu0 %v245
    %337 = vmatprep.subr.bf16.mxu0 %v248
    %338 = vmatpush1.bf16.msra.mxu0 %v247
    %339 = vmatprep.subr.bf16.mxu0 %v250
    %340 = vmatpush1.bf16.msra.mxu0 %v249
    %341 = vmatprep.subr.bf16.mxu0 0
    %342 = vmatpush1.bf16.msra.mxu0 0
    %343 = vmatprep.subr.bf16.mxu0 0
    %344 = vmatpush1.bf16.msra.mxu0 0
    %345 = vmatprep.subr.bf16.mxu0 0
    %346 = vmatpush1.bf16.msra.mxu0 0
    %347 = vmatprep.subr.bf16.mxu0 0
    %348 = vmatpush1.bf16.msra.mxu0 0
    %349 = vmatprep.subr.bf16.mxu0 0
    %350 = vmatpush1.bf16.msra.mxu0 0
    %351 = vmatprep.subr.bf16.mxu0 0
    %352 = vmatpush1.bf16.msra.mxu0 0
    %353 = vmatprep.subr.bf16.mxu0 0
    %354 = vmatpush1.bf16.msra.mxu0 0
    %355 = vmatprep.subr.bf16.mxu0 0
    %356 = vmatpush1.bf16.msra.mxu0 0
    %357 = vmatprep.subr.bf16.mxu0 0
    %358 = vmatpush1.bf16.msra.mxu0 0
    %359 = vmatprep.subr.bf16.mxu0 0
    %360 = vmatpush1.bf16.msra.mxu0 0
    %361 = vmatprep.subr.bf16.mxu0 0
    %362 = vmatpush1.bf16.msra.mxu0 0
    %363 = vmatprep.subr.bf16.mxu0 0
    %364 = vmatpush1.bf16.msra.mxu0 0
    %365 = vmatprep.mubr.bf16.mxu0 0
    %366 = vmatmul.mubr.bf16.gmra.mrb[0].mxu0 %v331
    %v367 = vpop.f32.mrb[0].mxu0
    %v368 = vadd.f32 0.0, %v367
    %v369 = vpop.f32.mrb[0].mxu0
    %v370 = vadd.f32 0.0, %v369
    %v371 = vpop.f32.mrb[0].mxu0
    %v372 = vpop.f32.mrb[0].mxu0
    %373 = vdwg.mxu0
    %v374 = vadd.f32 %v171, %v368
    %v375 = vadd.f32 %v173, %v370
    %v376 = vtanh.pop %v374
    %v377 = vtanh.pop %v375
    %v378 = vmul.f32 %v376, 0.5
    %v379 = vmul.f32 %v377, 0.5
    %v380 = vadd.f32 %v378, 0.5
    %v381 = vadd.f32 %v379, 0.5
    %v382 = vmul.f32 %v380, %v322
    %384 = vrot.lane.b32.xlu0 %v377, 64
    %v385 = vpop.permute.xlu0 %384
    %v387 = vmul.f32 %v380, %v385
    %389 = vrot.lane.b32.xlu0 %v387, 64
    %v390 = vpop.permute.xlu0 %389
    %v392 = vadd.f32 %v382, %v390
    %v393 = vtanh.pop %v392
    %395 = vrot.lane.b32.xlu0 %v393, 64
    %v396 = vpop.permute.xlu0 %395
    %v398 = vmul.f32 %v381, %v396
    %v399 = vpack.c.bf16 %v398, %v398
    %v401 = vsel %vm259, %v399, 0
    %403 = vmatprep.subr.bf16.mxu0 %v244
    %404 = vmatpush1.bf16.msra.mxu0 %v243
    %405 = vmatprep.subr.bf16.mxu0 %v246
    %406 = vmatpush1.bf16.msra.mxu0 %v245
    %407 = vmatprep.subr.bf16.mxu0 %v248
    %408 = vmatpush1.bf16.msra.mxu0 %v247
    %409 = vmatprep.subr.bf16.mxu0 %v250
    %410 = vmatpush1.bf16.msra.mxu0 %v249
    %411 = vmatprep.subr.bf16.mxu0 0
    %412 = vmatpush1.bf16.msra.mxu0 0
    %413 = vmatprep.subr.bf16.mxu0 0
    %414 = vmatpush1.bf16.msra.mxu0 0
    %415 = vmatprep.subr.bf16.mxu0 0
    %416 = vmatpush1.bf16.msra.mxu0 0
    %417 = vmatprep.subr.bf16.mxu0 0
    %418 = vmatpush1.bf16.msra.mxu0 0
    %419 = vmatprep.subr.bf16.mxu0 0
    %420 = vmatpush1.bf16.msra.mxu0 0
    %421 = vmatprep.subr.bf16.mxu0 0
    %422 = vmatpush1.bf16.msra.mxu0 0
    %423 = vmatprep.subr.bf16.mxu0 0
    %424 = vmatpush1.bf16.msra.mxu0 0
    %425 = vmatprep.subr.bf16.mxu0 0
    %426 = vmatpush1.bf16.msra.mxu0 0
    %427 = vmatprep.subr.bf16.mxu0 0
    %428 = vmatpush1.bf16.msra.mxu0 0
    %429 = vmatprep.subr.bf16.mxu0 0
    %430 = vmatpush1.bf16.msra.mxu0 0
    %431 = vmatprep.subr.bf16.mxu0 0
    %432 = vmatpush1.bf16.msra.mxu0 0
    %433 = vmatprep.subr.bf16.mxu0 0
    %434 = vmatpush1.bf16.msra.mxu0 0
    %435 = vmatprep.mubr.bf16.mxu0 0
    %436 = vmatmul.mubr.bf16.gmra.mrb[0].mxu0 %v401
    %v437 = vpop.f32.mrb[0].mxu0
    %v438 = vadd.f32 0.0, %v437
    %v439 = vpop.f32.mrb[0].mxu0
    %v440 = vadd.f32 0.0, %v439
    %v441 = vpop.f32.mrb[0].mxu0
    %v442 = vpop.f32.mrb[0].mxu0
    %443 = vdwg.mxu0
    %v444 = vadd.f32 %v177, %v438
    %v445 = vadd.f32 %v179, %v440
    %v446 = vtanh.pop %v444
    %v447 = vtanh.pop %v445
    %v448 = vmul.f32 %v446, 0.5
    %v449 = vmul.f32 %v447, 0.5
    %v450 = vadd.f32 %v448, 0.5
    %v451 = vadd.f32 %v449, 0.5
    %v452 = vmul.f32 %v450, %v392
    %454 = vrot.lane.b32.xlu0 %v447, 64
    %v455 = vpop.permute.xlu0 %454
    %v457 = vmul.f32 %v450, %v455
    %459 = vrot.lane.b32.xlu0 %v457, 64
    %v460 = vpop.permute.xlu0 %459
    %v462 = vadd.f32 %v452, %v460
    %v463 = vtanh.pop %v462
    %465 = vrot.lane.b32.xlu0 %v463, 64
    %v466 = vpop.permute.xlu0 %465
    %v468 = vmul.f32 %v451, %v466
    %v469 = vpack.c.bf16 %v468, %v468
    %v471 = vsel %vm259, %v469, 0
    %473 = vmatprep.subr.bf16.mxu0 %v244
    %474 = vmatpush1.bf16.msra.mxu0 %v243
    %475 = vmatprep.subr.bf16.mxu0 %v246
    %476 = vmatpush1.bf16.msra.mxu0 %v245
    %477 = vmatprep.subr.bf16.mxu0 %v248
    %478 = vmatpush1.bf16.msra.mxu0 %v247
    %479 = vmatprep.subr.bf16.mxu0 %v250
    %480 = vmatpush1.bf16.msra.mxu0 %v249
    %481 = vmatprep.subr.bf16.mxu0 0
    %482 = vmatpush1.bf16.msra.mxu0 0
    %483 = vmatprep.subr.bf16.mxu0 0
    %484 = vmatpush1.bf16.msra.mxu0 0
    %485 = vmatprep.subr.bf16.mxu0 0
    %486 = vmatpush1.bf16.msra.mxu0 0
    %487 = vmatprep.subr.bf16.mxu0 0
    %488 = vmatpush1.bf16.msra.mxu0 0
    %489 = vmatprep.subr.bf16.mxu0 0
    %490 = vmatpush1.bf16.msra.mxu0 0
    %491 = vmatprep.subr.bf16.mxu0 0
    %492 = vmatpush1.bf16.msra.mxu0 0
    %493 = vmatprep.subr.bf16.mxu0 0
    %494 = vmatpush1.bf16.msra.mxu0 0
    %495 = vmatprep.subr.bf16.mxu0 0
    %496 = vmatpush1.bf16.msra.mxu0 0
    %497 = vmatprep.subr.bf16.mxu0 0
    %498 = vmatpush1.bf16.msra.mxu0 0
    %499 = vmatprep.subr.bf16.mxu0 0
    %500 = vmatpush1.bf16.msra.mxu0 0
    %501 = vmatprep.subr.bf16.mxu0 0
    %502 = vmatpush1.bf16.msra.mxu0 0
    %503 = vmatprep.subr.bf16.mxu0 0
    %504 = vmatpush1.bf16.msra.mxu0 0
    %505 = vmatprep.mubr.bf16.mxu0 0
    %506 = vmatmul.mubr.bf16.gmra.mrb[0].mxu0 %v471
    %v507 = vpop.f32.mrb[0].mxu0
    %v508 = vadd.f32 0.0, %v507
    %v509 = vpop.f32.mrb[0].mxu0
    %v510 = vadd.f32 0.0, %v509
    %v511 = vpop.f32.mrb[0].mxu0
    %v512 = vpop.f32.mrb[0].mxu0
    %513 = vdwg.mxu0
    %v514 = vadd.f32 %v183, %v508
    %v515 = vadd.f32 %v185, %v510
    %v516 = vtanh.pop %v514
    %v517 = vtanh.pop %v515
    %v518 = vmul.f32 %v516, 0.5
    %v519 = vmul.f32 %v517, 0.5
    %v520 = vadd.f32 %v518, 0.5
    %v521 = vadd.f32 %v519, 0.5
    %v522 = vmul.f32 %v520, %v462
    %524 = vrot.lane.b32.xlu0 %v517, 64
    %v525 = vpop.permute.xlu0 %524
    %v527 = vmul.f32 %v520, %v525
    %529 = vrot.lane.b32.xlu0 %v527, 64
    %v530 = vpop.permute.xlu0 %529
    %v532 = vadd.f32 %v522, %v530
    %v533 = vtanh.pop %v532
    %535 = vrot.lane.b32.xlu0 %v533, 64
    %v536 = vpop.permute.xlu0 %535
    %v538 = vmul.f32 %v521, %v536
    %v539 = vpack.c.bf16 %v538, %v538
    %v541 = vsel %vm259, %v539, 0
    %543 = vmatprep.subr.bf16.mxu0 %v244
    %544 = vmatpush1.bf16.msra.mxu0 %v243
    %545 = vmatprep.subr.bf16.mxu0 %v246
    %546 = vmatpush1.bf16.msra.mxu0 %v245
    %547 = vmatprep.subr.bf16.mxu0 %v248
    %548 = vmatpush1.bf16.msra.mxu0 %v247
    %549 = vmatprep.subr.bf16.mxu0 %v250
    %550 = vmatpush1.bf16.msra.mxu0 %v249
    %551 = vmatprep.subr.bf16.mxu0 0
    %552 = vmatpush1.bf16.msra.mxu0 0
    %553 = vmatprep.subr.bf16.mxu0 0
    %554 = vmatpush1.bf16.msra.mxu0 0
    %555 = vmatprep.subr.bf16.mxu0 0
    %556 = vmatpush1.bf16.msra.mxu0 0
    %557 = vmatprep.subr.bf16.mxu0 0
    %558 = vmatpush1.bf16.msra.mxu0 0
    %559 = vmatprep.subr.bf16.mxu0 0
    %560 = vmatpush1.bf16.msra.mxu0 0
    %561 = vmatprep.subr.bf16.mxu0 0
    %562 = vmatpush1.bf16.msra.mxu0 0
    %563 = vmatprep.subr.bf16.mxu0 0
    %564 = vmatpush1.bf16.msra.mxu0 0
    %565 = vmatprep.subr.bf16.mxu0 0
    %566 = vmatpush1.bf16.msra.mxu0 0
    %567 = vmatprep.subr.bf16.mxu0 0
    %568 = vmatpush1.bf16.msra.mxu0 0
    %569 = vmatprep.subr.bf16.mxu0 0
    %570 = vmatpush1.bf16.msra.mxu0 0
    %571 = vmatprep.subr.bf16.mxu0 0
    %572 = vmatpush1.bf16.msra.mxu0 0
    %573 = vmatprep.subr.bf16.mxu0 0
    %574 = vmatpush1.bf16.msra.mxu0 0
    %575 = vmatprep.mubr.bf16.mxu0 0
    %576 = vmatmul.mubr.bf16.gmra.mrb[0].mxu0 %v541
    %v577 = vpop.f32.mrb[0].mxu0
    %v578 = vadd.f32 0.0, %v577
    %v579 = vpop.f32.mrb[0].mxu0
    %v580 = vadd.f32 0.0, %v579
    %v581 = vpop.f32.mrb[0].mxu0
    %v582 = vpop.f32.mrb[0].mxu0
    %583 = vdwg.mxu0
    %v584 = vadd.f32 %v189, %v578
    %v585 = vadd.f32 %v191, %v580
    %v586 = vtanh.pop %v584
    %v587 = vtanh.pop %v585
    %v588 = vmul.f32 %v586, 0.5
    %v589 = vmul.f32 %v587, 0.5
    %v590 = vadd.f32 %v588, 0.5
    %v591 = vadd.f32 %v589, 0.5
    %v592 = vmul.f32 %v590, %v532
    %594 = vrot.lane.b32.xlu0 %v587, 64
    %v595 = vpop.permute.xlu0 %594
    %v597 = vmul.f32 %v590, %v595
    %599 = vrot.lane.b32.xlu0 %v597, 64
    %v600 = vpop.permute.xlu0 %599
    %v602 = vadd.f32 %v592, %v600
    %v603 = vtanh.pop %v602
    %605 = vrot.lane.b32.xlu0 %v603, 64
    %v606 = vpop.permute.xlu0 %605
    %v608 = vmul.f32 %v591, %v606
    %v609 = vpack.c.bf16 %v608, %v608
    %v611 = vsel %vm259, %v609, 0
    %613 = vmatprep.subr.bf16.mxu0 %v244
    %614 = vmatpush1.bf16.msra.mxu0 %v243
    %615 = vmatprep.subr.bf16.mxu0 %v246
    %616 = vmatpush1.bf16.msra.mxu0 %v245
    %617 = vmatprep.subr.bf16.mxu0 %v248
    %618 = vmatpush1.bf16.msra.mxu0 %v247
    %619 = vmatprep.subr.bf16.mxu0 %v250
    %620 = vmatpush1.bf16.msra.mxu0 %v249
    %621 = vmatprep.subr.bf16.mxu0 0
    %622 = vmatpush1.bf16.msra.mxu0 0
    %623 = vmatprep.subr.bf16.mxu0 0
    %624 = vmatpush1.bf16.msra.mxu0 0
    %625 = vmatprep.subr.bf16.mxu0 0
    %626 = vmatpush1.bf16.msra.mxu0 0
    %627 = vmatprep.subr.bf16.mxu0 0
    %628 = vmatpush1.bf16.msra.mxu0 0
    %629 = vmatprep.subr.bf16.mxu0 0
    %630 = vmatpush1.bf16.msra.mxu0 0
    %631 = vmatprep.subr.bf16.mxu0 0
    %632 = vmatpush1.bf16.msra.mxu0 0
    %633 = vmatprep.subr.bf16.mxu0 0
    %634 = vmatpush1.bf16.msra.mxu0 0
    %635 = vmatprep.subr.bf16.mxu0 0
    %636 = vmatpush1.bf16.msra.mxu0 0
    %637 = vmatprep.subr.bf16.mxu0 0
    %638 = vmatpush1.bf16.msra.mxu0 0
    %639 = vmatprep.subr.bf16.mxu0 0
    %640 = vmatpush1.bf16.msra.mxu0 0
    %641 = vmatprep.subr.bf16.mxu0 0
    %642 = vmatpush1.bf16.msra.mxu0 0
    %643 = vmatprep.subr.bf16.mxu0 0
    %644 = vmatpush1.bf16.msra.mxu0 0
    %645 = vmatprep.mubr.bf16.mxu0 0
    %646 = vmatmul.mubr.bf16.gmra.mrb[0].mxu0 %v611
    %v647 = vpop.f32.mrb[0].mxu0
    %v648 = vadd.f32 0.0, %v647
    %v649 = vpop.f32.mrb[0].mxu0
    %v650 = vadd.f32 0.0, %v649
    %v651 = vpop.f32.mrb[0].mxu0
    %v652 = vpop.f32.mrb[0].mxu0
    %653 = vdwg.mxu0
    %v654 = vadd.f32 %v195, %v648
    %v655 = vadd.f32 %v197, %v650
    %v656 = vtanh.pop %v654
    %v657 = vtanh.pop %v655
    %v658 = vmul.f32 %v656, 0.5
    %v659 = vmul.f32 %v657, 0.5
    %v660 = vadd.f32 %v658, 0.5
    %v661 = vadd.f32 %v659, 0.5
    %v662 = vmul.f32 %v660, %v602
    %664 = vrot.lane.b32.xlu0 %v657, 64
    %v665 = vpop.permute.xlu0 %664
    %v667 = vmul.f32 %v660, %v665
    %669 = vrot.lane.b32.xlu0 %v667, 64
    %v670 = vpop.permute.xlu0 %669
    %v672 = vadd.f32 %v662, %v670
    %v673 = vtanh.pop %v672
    %675 = vrot.lane.b32.xlu0 %v673, 64
    %v676 = vpop.permute.xlu0 %675
    %v678 = vmul.f32 %v661, %v676
    %v679 = vpack.c.bf16 %v678, %v678
    %v681 = vsel %vm259, %v679, 0
    %683 = vmatprep.subr.bf16.mxu0 %v244
    %684 = vmatpush1.bf16.msra.mxu0 %v243
    %685 = vmatprep.subr.bf16.mxu0 %v246
    %686 = vmatpush1.bf16.msra.mxu0 %v245
    %687 = vmatprep.subr.bf16.mxu0 %v248
    %688 = vmatpush1.bf16.msra.mxu0 %v247
    %689 = vmatprep.subr.bf16.mxu0 %v250
    %690 = vmatpush1.bf16.msra.mxu0 %v249
    %691 = vmatprep.subr.bf16.mxu0 0
    %692 = vmatpush1.bf16.msra.mxu0 0
    %693 = vmatprep.subr.bf16.mxu0 0
    %694 = vmatpush1.bf16.msra.mxu0 0
    %695 = vmatprep.subr.bf16.mxu0 0
    %696 = vmatpush1.bf16.msra.mxu0 0
    %697 = vmatprep.subr.bf16.mxu0 0
    %698 = vmatpush1.bf16.msra.mxu0 0
    %699 = vmatprep.subr.bf16.mxu0 0
    %700 = vmatpush1.bf16.msra.mxu0 0
    %701 = vmatprep.subr.bf16.mxu0 0
    %702 = vmatpush1.bf16.msra.mxu0 0
    %703 = vmatprep.subr.bf16.mxu0 0
    %704 = vmatpush1.bf16.msra.mxu0 0
    %705 = vmatprep.subr.bf16.mxu0 0
    %706 = vmatpush1.bf16.msra.mxu0 0
    %707 = vmatprep.subr.bf16.mxu0 0
    %708 = vmatpush1.bf16.msra.mxu0 0
    %709 = vmatprep.subr.bf16.mxu0 0
    %710 = vmatpush1.bf16.msra.mxu0 0
    %711 = vmatprep.subr.bf16.mxu0 0
    %712 = vmatpush1.bf16.msra.mxu0 0
    %713 = vmatprep.subr.bf16.mxu0 0
    %714 = vmatpush1.bf16.msra.mxu0 0
    %715 = vmatprep.mubr.bf16.mxu0 0
    %716 = vmatmul.mubr.bf16.gmra.mrb[0].mxu0 %v681
    %v717 = vpop.f32.mrb[0].mxu0
    %v718 = vadd.f32 0.0, %v717
    %v719 = vpop.f32.mrb[0].mxu0
    %v720 = vadd.f32 0.0, %v719
    %v721 = vpop.f32.mrb[0].mxu0
    %v722 = vpop.f32.mrb[0].mxu0
    %723 = vdwg.mxu0
    %v724 = vadd.f32 %v201, %v718
    %v725 = vadd.f32 %v203, %v720
    %v726 = vtanh.pop %v724
    %v727 = vtanh.pop %v725
    %v728 = vmul.f32 %v726, 0.5
    %v729 = vmul.f32 %v727, 0.5
    %v730 = vadd.f32 %v728, 0.5
    %v731 = vadd.f32 %v729, 0.5
    %v732 = vmul.f32 %v730, %v672
    %734 = vrot.lane.b32.xlu0 %v727, 64
    %v735 = vpop.permute.xlu0 %734
    %v737 = vmul.f32 %v730, %v735
    %739 = vrot.lane.b32.xlu0 %v737, 64
    %v740 = vpop.permute.xlu0 %739
    %v742 = vadd.f32 %v732, %v740
    %v743 = vtanh.pop %v742
    %745 = vrot.lane.b32.xlu0 %v743, 64
    %v746 = vpop.permute.xlu0 %745
    %v748 = vmul.f32 %v731, %v746
    %v749 = vpack.c.bf16 %v748, %v748
    %v751 = vsel %vm259, %v749, 0
    %753 = vmatprep.subr.bf16.mxu0 %v244
    %754 = vmatpush1.bf16.msra.mxu0 %v243
    %755 = vmatprep.subr.bf16.mxu0 %v246
    %756 = vmatpush1.bf16.msra.mxu0 %v245
    %757 = vmatprep.subr.bf16.mxu0 %v248
    %758 = vmatpush1.bf16.msra.mxu0 %v247
    %759 = vmatprep.subr.bf16.mxu0 %v250
    %760 = vmatpush1.bf16.msra.mxu0 %v249
    %761 = vmatprep.subr.bf16.mxu0 0
    %762 = vmatpush1.bf16.msra.mxu0 0
    %763 = vmatprep.subr.bf16.mxu0 0
    %764 = vmatpush1.bf16.msra.mxu0 0
    %765 = vmatprep.subr.bf16.mxu0 0
    %766 = vmatpush1.bf16.msra.mxu0 0
    %767 = vmatprep.subr.bf16.mxu0 0
    %768 = vmatpush1.bf16.msra.mxu0 0
    %769 = vmatprep.subr.bf16.mxu0 0
    %770 = vmatpush1.bf16.msra.mxu0 0
    %771 = vmatprep.subr.bf16.mxu0 0
    %772 = vmatpush1.bf16.msra.mxu0 0
    %773 = vmatprep.subr.bf16.mxu0 0
    %774 = vmatpush1.bf16.msra.mxu0 0
    %775 = vmatprep.subr.bf16.mxu0 0
    %776 = vmatpush1.bf16.msra.mxu0 0
    %777 = vmatprep.subr.bf16.mxu0 0
    %778 = vmatpush1.bf16.msra.mxu0 0
    %779 = vmatprep.subr.bf16.mxu0 0
    %780 = vmatpush1.bf16.msra.mxu0 0
    %781 = vmatprep.subr.bf16.mxu0 0
    %782 = vmatpush1.bf16.msra.mxu0 0
    %783 = vmatprep.subr.bf16.mxu0 0
    %784 = vmatpush1.bf16.msra.mxu0 0
    %785 = vmatprep.mubr.bf16.mxu0 0
    %786 = vmatmul.mubr.bf16.gmra.mrb[0].mxu0 %v751
    %v787 = vpop.f32.mrb[0].mxu0
    %v788 = vadd.f32 0.0, %v787
    %v789 = vpop.f32.mrb[0].mxu0
    %v790 = vadd.f32 0.0, %v789
    %v791 = vpop.f32.mrb[0].mxu0
    %v792 = vpop.f32.mrb[0].mxu0
    %793 = vdwg.mxu0
    %v794 = vadd.f32 %v207, %v788
    %v795 = vadd.f32 %v209, %v790
    %v796 = vtanh.pop %v794
    %v797 = vtanh.pop %v795
    %v798 = vmul.f32 %v796, 0.5
    %v799 = vmul.f32 %v797, 0.5
    %v800 = vadd.f32 %v798, 0.5
    %v801 = vadd.f32 %v799, 0.5
    %v802 = vmul.f32 %v800, %v742
    %804 = vrot.lane.b32.xlu0 %v797, 64
    %v805 = vpop.permute.xlu0 %804
    %v807 = vmul.f32 %v800, %v805
    %809 = vrot.lane.b32.xlu0 %v807, 64
    %v810 = vpop.permute.xlu0 %809
    %v812 = vadd.f32 %v802, %v810
    %v813 = vtanh.pop %v812
    %815 = vrot.lane.b32.xlu0 %v813, 64
    %v816 = vpop.permute.xlu0 %815
    %v818 = vmul.f32 %v801, %v816
    %v819 = vld [vmem:[#allocation5] sm:$0xff]
    %v820 = vld [vmem:[#allocation5 + $0x8] sm:$0xff]
    %v821 = vld [vmem:[#allocation5 + $0x10] sm:$0xff]
    %v822 = vld [vmem:[#allocation5 + $0x18] sm:$0xff]
    %v823 = vld [vmem:[#allocation5 + $0x20] sm:$0xff]
    %v824 = vld [vmem:[#allocation5 + $0x28] sm:$0xff]
    %v825 = vld [vmem:[#allocation5 + $0x30] sm:$0xff]
    %v826 = vld [vmem:[#allocation5 + $0x38] sm:$0xff]
    %v827 = vld [vmem:[%s4] sm:$0x1]
    %v829 = vlaneseq
    %v830 = vshrl.u32 %v829, 7
    %v831 = vsub.s32 0, %v830
    %v832 = vrot.slane %v827, %v831
    %v835 = vsel %vm259, %v818, 0
    %837 = vmatprep.subr.mxu0 0.0
    %838 = vmatpush1.msra.mxu0 %v819
    %839 = vmatprep.subr.mxu0 0.0
    %840 = vmatpush1.msra.mxu0 %v820
    %841 = vmatprep.subr.mxu0 0.0
    %842 = vmatpush1.msra.mxu0 %v821
    %843 = vmatprep.subr.mxu0 0.0
    %844 = vmatpush1.msra.mxu0 %v822
    %845 = vmatprep.subr.mxu0 0.0
    %846 = vmatpush1.msra.mxu0 %v823
    %847 = vmatprep.subr.mxu0 0.0
    %848 = vmatpush1.msra.mxu0 %v824
    %849 = vmatprep.subr.mxu0 0.0
    %850 = vmatpush1.msra.mxu0 %v825
    %851 = vmatprep.subr.mxu0 0.0
    %852 = vmatpush1.msra.mxu0 %v826
    %853 = vmatprep.subr.mxu0 0.0
    %854 = vmatpush1.msra.mxu0 0.0
    %855 = vmatprep.subr.mxu0 0.0
    %856 = vmatpush1.msra.mxu0 0.0
    %857 = vmatprep.subr.mxu0 0.0
    %858 = vmatpush1.msra.mxu0 0.0
    %859 = vmatprep.subr.mxu0 0.0
    %860 = vmatpush1.msra.mxu0 0.0
    %861 = vmatprep.subr.mxu0 0.0
    %862 = vmatpush1.msra.mxu0 0.0
    %863 = vmatprep.subr.mxu0 0.0
    %864 = vmatpush1.msra.mxu0 0.0
    %865 = vmatprep.subr.mxu0 0.0
    %866 = vmatpush1.msra.mxu0 0.0
    %867 = vmatprep.subr.mxu0 0.0
    %868 = vmatpush1.msra.mxu0 0.0
    %869 = vmatprep.subr.mxu0 0.0
    %870 = vmatpush1.msra.mxu0 0.0
    %871 = vmatprep.subr.mxu0 0.0
    %872 = vmatpush1.msra.mxu0 0.0
    %873 = vmatprep.subr.mxu0 0.0
    %874 = vmatpush1.msra.mxu0 0.0
    %875 = vmatprep.subr.mxu0 0.0
    %876 = vmatpush1.msra.mxu0 0.0
    %877 = vmatprep.subr.mxu0 0.0
    %878 = vmatpush1.msra.mxu0 0.0
    %879 = vmatprep.subr.mxu0 0.0
    %880 = vmatpush1.msra.mxu0 0.0
    %881 = vmatprep.subr.mxu0 0.0
    %882 = vmatpush1.msra.mxu0 0.0
    %883 = vmatprep.subr.mxu0 0.0
    %884 = vmatpush1.msra.mxu0 0.0
    %885 = vmatprep.subr.mxu0 0.0
    %886 = vmatpush1.msra.mxu0 0.0
    %887 = vmatprep.subr.mxu0 0.0
    %888 = vmatpush1.msra.mxu0 0.0
    %889 = vmatprep.subr.mxu0 0.0
    %890 = vmatpush1.msra.mxu0 0.0
    %891 = vmatprep.subr.mxu0 0.0
    %892 = vmatpush1.msra.mxu0 0.0
    %893 = vmatprep.subr.mxu0 0.0
    %894 = vmatpush1.msra.mxu0 0.0
    %895 = vmatprep.subr.mxu0 0.0
    %896 = vmatpush1.msra.mxu0 0.0
    %897 = vmatprep.subr.mxu0 0.0
    %898 = vmatpush1.msra.mxu0 0.0
    %899 = vmatprep.subr.mxu0 0.0
    %900 = vmatpush1.msra.mxu0 0.0
    %901 = vmatprep.mubr.f32.mxu0 0.0
    %902 = vmatmul.mubr.f32.gmra.mrb[0].mxu0 %v835
    %v903 = vpop.f32.mrb[0].mxu0
    %v904 = vadd.f32 %v832, %v903
    %v905 = vpop.f32.mrb[0].mxu0
    %906 = vdwg.mxu0
    %907 = vst [vmem:[#allocation7] sm:$0xff] %v904
    // Predicated region
    $region30: #{tpu_custom_call.1} parent=1 // pred_check
      _
    $region31: #{tpu_custom_call.1} parent=1 // pred_check_branch
      %909 = sbr.rel (0) target = $region33
    $region32: #{tpu_custom_call.1} parent=1 // pred_region
      %s911 = ssub.s32 128, 128
      %912 = vsyncadd [#allocation4], %s911
      %s914 = sshll.u32 [#allocation7], 4
      %s915 = int_to_ptr.vmem [resolvable:$true] %s914
      %917 = dma.vmem_to_hbm [thread:$0]  %s915, 128, %s5, [#allocation4]
    $region33: #{tpu_custom_call.1} parent=1 // pred_fallthru
      _
    // Predicated region
    $region34: #{tpu_custom_call.1} parent=1 // pred_check
      _
    $region35: #{tpu_custom_call.1} parent=1 // pred_check_branch
      %919 = sbr.rel (0) target = $region37
    $region36: #{tpu_custom_call.1} parent=1 // pred_region
      %920 = dma.done [#allocation4], 128
    $region37: #{tpu_custom_call.1} parent=1 // pred_fallthru
      _
    %921 = vsyncpa [#allocation3], 1
    %922 = vsyncpa [#allocation6], 1
    %923 = vsyncpa [#allocation4], 1

</llo_original>
